<compile_context>
chip_gen: v7x
topology: tpu7x:2x2x1
jax: 0.10.0
libtpu: 0.0.40
codegen_flags: <defaults>
</compile_context>

<pallas_src>
import functools
import math

import jax
import jax.numpy as jnp
from jax.experimental import pallas as pl
from jax.experimental.pallas import tpu as pltpu

INV_SQRT2 = 1.0 / math.sqrt(2.0)
LANES = 128


# ----------------------------------------------------------------------------
# Chip-aware configuration
# ----------------------------------------------------------------------------
@functools.lru_cache(maxsize=1)
def _chip_config():
    kind = ""
    try:
        kind = jax.devices()[0].device_kind.lower()
    except Exception:
        pass
    if "v7" in kind:
        # 3.2 TB/s per TC: big blocks to amortize grid-step overhead; 4 x 8 MiB
        # double-buffered in+out exceeds the 32 MiB scoped default -> raise it.
        return {"block_bytes": 8 << 20, "vmem_limit": 48 << 20,
                "native_low_precision": True, "num_tensorcores": 2}
    if "v6" in kind:
        # 4 MiB blocks -> 16 MiB double-buffered, fits the 32 MiB default.
        return {"block_bytes": 4 << 20, "vmem_limit": None,
                "native_low_precision": True, "num_tensorcores": 1}
    # v5e / v5p / unknown: conservative. 2 MiB blocks -> 8 MiB double-buffered,
    # fits v5e's 16 MiB scoped-VMEM default; f32 compute (no bf16 VPU/EUP).
    return {"block_bytes": 2 << 20, "vmem_limit": None,
            "native_low_precision": False, "num_tensorcores": 1}


def _round_up(v, unit):
    return -(-v // unit) * unit


def _pick_tile_rows(dtype, rows, cfg):
    itemsize = jnp.dtype(dtype).itemsize
    unit = max(8, 32 // itemsize)                      # sublane packing unit
    tr = cfg["block_bytes"] // (LANES * itemsize)      # rows per target block
    if cfg["num_tensorcores"] > 1:
        # Keep >= ~4 grid steps so the "parallel" axis feeds both TensorCores.
        tr = min(tr, _round_up(pl.cdiv(rows, 4), unit))
    tr = min(tr, _round_up(rows, unit))                # don't over-allocate
    tr = max(unit, (tr // unit) * unit)                # multiple of the unit
    return tr


# ----------------------------------------------------------------------------
# Kernel
# ----------------------------------------------------------------------------
def _make_gelu_kernel(compute_dtype):
    def kernel(x_ref, o_ref):
        # NOTE: the last grid block may be ragged in the row dimension; the
        # out-of-bounds part of the tile holds unspecified values.  Computing
        # erf on them is safe (no FP traps on TPU) and Pallas discards the
        # out-of-bounds stores — do not "fix" this by reading that data.
        x = x_ref[...].astype(compute_dtype)
        # exact BERT GELU with constants folded: x * (0.5 + 0.5 * erf(x/sqrt(2)))
        y = x * (0.5 + 0.5 * jax.lax.erf(x * INV_SQRT2))
        o_ref[...] = y.astype(o_ref.dtype)
    return kernel


def _run_gelu_kernel(x2d, tile_rows, compute_dtype, vmem_limit):
    rows, lanes = x2d.shape
    cp_kwargs = dict(dimension_semantics=("parallel",))
    if vmem_limit is not None:
        cp_kwargs["vmem_limit_bytes"] = vmem_limit
    return pl.pallas_call(
        _make_gelu_kernel(compute_dtype),
        out_shape=jax.ShapeDtypeStruct((rows, lanes), x2d.dtype),
        grid_spec=pltpu.PrefetchScalarGridSpec(
            num_scalar_prefetch=0,
            grid=(pl.cdiv(rows, tile_rows),),
            in_specs=[pl.BlockSpec((tile_rows, lanes), lambda i: (i, 0))],
            out_specs=pl.BlockSpec((tile_rows, lanes), lambda i: (i, 0)),
        ),
        compiler_params=pltpu.CompilerParams(**cp_kwargs),
    )(x2d)


# ----------------------------------------------------------------------------
# Wrapper (jitted: ravel / slice / kernel / concat / reshape are one program)
# ----------------------------------------------------------------------------
@functools.partial(jax.jit, static_argnames=("force_f32_compute",))
def _gelu_impl(x, force_f32_compute=False):
    orig_shape, orig_dtype = x.shape, x.dtype
    cfg = _chip_config()

    if jnp.issubdtype(orig_dtype, jnp.floating) and jnp.dtype(orig_dtype).itemsize < 4 \
            and cfg["native_low_precision"] and not force_f32_compute:
        compute_dtype = orig_dtype          # bf16/f16 native on v6e/v7x
    else:
        compute_dtype = jnp.float32         # f32 path (v5e, f32 inputs, ints)

    n = x.size
    x_flat = x.reshape(-1)
    tail = n % LANES
    m = n - tail

    pieces = []
    if m > 0:
        x_main = x_flat if tail == 0 else x_flat[:m]
        rows = m // LANES
        x2d = x_main.reshape(rows, LANES)
        tr = _pick_tile_rows(orig_dtype, rows, cfg)
        out2d = _run_gelu_kernel(x2d, tr, compute_dtype, cfg["vmem_limit"])
        pieces.append(out2d.reshape(-1))
    if tail > 0:
        # <=127-element tail: tiny plain-XLA GELU, negligible traffic.
        xt = x_flat[m:].astype(jnp.float32)
        yt = 0.5 * xt * (1.0 + jax.lax.erf(xt * INV_SQRT2))
        pieces.append(yt.astype(orig_dtype))

    out_flat = pieces[0] if len(pieces) == 1 else jnp.concatenate(pieces)
    return out_flat.reshape(orig_shape)


def gelu_bert(x: jax.Array) -> jax.Array:
    """Exact GELU (BERT style, erf-based) applied elementwise via Pallas on TPU."""
    if x.size == 0:
        return x
    cfg = _chip_config()
    force_f32 = not cfg["native_low_precision"]
    try:
        return _gelu_impl(x, force_f32_compute=force_f32)
    except Exception:
        # Safety net: if the native low-precision erf lowering is unavailable
        # on this chip/toolchain, fall back to f32 internal compute.
        if not force_f32:
            return _gelu_impl(x, force_f32_compute=True)
        raise


def _ref_gelu(x):
    xf = x.astype(jnp.float32)
    return 0.5 * xf * (1.0 + jax.lax.erf(xf / jnp.float32(math.sqrt(2.0))))


if __name__ == "__main__":
    key = jax.random.PRNGKey(0)
    k0, k1, k2, k3 = jax.random.split(key, 4)

    # Primary small input consistent with the module's elementwise forward.
    x = jax.random.normal(k0, (2, 4, 16, 16), dtype=jnp.float32)
    y = gelu_bert(x)
    jax.block_until_ready(y)
    assert y.shape == x.shape and y.dtype == x.dtype
    assert jnp.allclose(y, _ref_gelu(x), atol=1e-6, rtol=1e-6)

    # Lane-aligned but row-ragged w.r.t. the tile: exercises the cdiv grid's
    # masked last block.
    x2 = jax.random.normal(k1, (4100, 128), dtype=jnp.float32)
    y2 = gelu_bert(x2)
    jax.block_until_ready(y2)
    assert jnp.allclose(y2, _ref_gelu(x2), atol=1e-6, rtol=1e-6)

    # Flat size not a multiple of 128: kernel on the aligned prefix + tiny
    # plain-XLA tail (no full-tensor pad/slice copies).
    x3 = jax.random.normal(k2, (33, 100), dtype=jnp.float32)
    y3 = gelu_bert(x3)
    jax.block_until_ready(y3)
    assert y3.shape == x3.shape
    assert jnp.allclose(y3, _ref_gelu(x3), atol=1e-6, rtol=1e-6)

    # bf16 input: native bf16 compute on v6e/v7x, f32-upcast path on v5e.
    x4 = jax.random.normal(k3, (16, 256), dtype=jnp.bfloat16)
    y4 = gelu_bert(x4)
    jax.block_until_ready(y4)
    assert y4.dtype == jnp.bfloat16
    assert jnp.allclose(y4.astype(jnp.float32), _ref_gelu(x4), atol=5e-2, rtol=5e-2)

    print("KERNEL_OK")
</pallas_src>

<mosaic_0001>
module attributes {stable_mosaic.version = 11 : i64} {
  func.func @kernel(%arg0: i32, %arg1: memref<16x128xf32, #tpu.memory_space<vmem>>, %arg2: memref<16x128xf32, #tpu.memory_space<vmem>>) attributes {dimension_semantics = [#tpu.dimension_semantics<parallel>], iteration_bounds = array<i64: 1>, scalar_prefetch = 0 : i64, scratch_operands = 0 : i64, tpu.core_type = #tpu.core_type<tc>, window_params = [{transform_indices = @transform_0, window_bounds = array<i64: 16, 128>}, {transform_indices = @transform_1, window_bounds = array<i64: 16, 128>}]} {
    %c0 = arith.constant 0 : index
    %c0_0 = arith.constant 0 : index
    %0 = vector.load %arg1[%c0, %c0_0] : memref<16x128xf32, #tpu.memory_space<vmem>>, vector<16x128xf32>
    %cst = arith.constant 0.707106769 : f32
    %1 = vector.broadcast %cst : f32 to vector<16x128xf32>
    %2 = arith.mulf %0, %1 : vector<16x128xf32>
    %3 = math.erf %2 : vector<16x128xf32>
    %cst_1 = arith.constant 5.000000e-01 : f32
    %4 = vector.broadcast %cst_1 : f32 to vector<16x128xf32>
    %5 = arith.mulf %4, %3 : vector<16x128xf32>
    %cst_2 = arith.constant 5.000000e-01 : f32
    %6 = vector.broadcast %cst_2 : f32 to vector<16x128xf32>
    %7 = arith.addf %6, %5 : vector<16x128xf32>
    %8 = arith.mulf %0, %7 : vector<16x128xf32>
    %c0_3 = arith.constant 0 : index
    %c0_4 = arith.constant 0 : index
    %9 = vector.load %arg2[%c0_3, %c0_4] : memref<16x128xf32, #tpu.memory_space<vmem>>, vector<16x128xf32>
    tpu.vector_store %arg2[%c0_3, %c0_4], %8 {strides = array<i32>} : memref<16x128xf32, #tpu.memory_space<vmem>>, vector<16x128xf32>,
    return
  }
  func.func @transform_0(%arg0: i32) -> (i32, i32) {
    %c0_i32 = arith.constant 0 : i32
    %c0_i32_0 = arith.constant 0 : i32
    return %arg0, %c0_i32 : i32, i32
  }
  func.func @transform_1(%arg0: i32) -> (i32, i32) {
    %c0_i32 = arith.constant 0 : i32
    %c0_i32_0 = arith.constant 0 : i32
    return %arg0, %c0_i32 : i32, i32
  }
}

</mosaic_0001>

<llo_original>
// kernel: _gelu_impl.1
$region0: #{_gelu_impl.1}
  #allocation0 [shape = 'u32[]', space=smem, size = 0x4, offset = 0x4, fixed_abs, tag = 'smem constant byte address 0x4 - core index']
  #allocation1 [shape = 'u32[144,128]{1,0:T(1,128)}', space=vmem, size = 0x12000, scoped, tag = 'internal scratch']
  %s0 = inlined_call_operand.vmem [shape: f32[16,128], index: 0, kind: input, shape index: {}]
  %s1 = inlined_call_operand.vmem [shape: f32[16,128], index: 1, kind: output, shape index: {}]
  %s2 = sld [smem:[#allocation0]]
  $region14: #{_gelu_impl.1} parent=0
    _
  %s4 = ssub.s32 1, %s2
  %s5 = scalar_select 0, %s4, %s2
  // Predicated region
  $region2: #{_gelu_impl.1} parent=0 // pred_check
    _
  $region3: #{_gelu_impl.1} parent=0 // pred_check_branch
    %7 = sbr.rel (0) target = $region5
  $region4: #{_gelu_impl.1} parent=0 // pred_region
    _
  $region5: #{_gelu_impl.1} parent=0 // pred_fallthru
    _
  %v8 = vld [vmem:[%s0] sm:$0xff]
  %v9 = vld [vmem:[%s0 + $0x8] sm:$0xff]
  %v10 = vmul.f32 %v8, 0.70710677
  %v11 = vmul.f32 %v9, 0.70710677
  %v12 = verf.f32.pop %v10
  %v13 = verf.f32.pop %v11
  %v14 = vmul.f32 %v12, 0.5
  %v15 = vmul.f32 %v13, 0.5
  %v16 = vadd.f32 %v14, 0.5
  %v17 = vadd.f32 %v15, 0.5
  %v18 = vmul.f32 %v8, %v16
  %v19 = vmul.f32 %v9, %v17
  %20 = vst [vmem:[%s1] sm:$0xff] %v18
  %21 = vst [vmem:[%s1 + $0x8] sm:$0xff] %v19
  // Predicated region
  $region6: #{_gelu_impl.1} parent=0 // pred_check
    _
  $region7: #{_gelu_impl.1} parent=0 // pred_check_branch
    %23 = sbr.rel (0) target = $region9
  $region8: #{_gelu_impl.1} parent=0 // pred_region
    _
  $region9: #{_gelu_impl.1} parent=0 // pred_fallthru
    _
  // Predicated region
  $region10: #{_gelu_impl.1} parent=0 // pred_check
    _
  $region11: #{_gelu_impl.1} parent=0 // pred_check_branch
    %25 = sbr.rel (0) target = $region13
  $region12: #{_gelu_impl.1} parent=0 // pred_region
    _
  $region13: #{_gelu_impl.1} parent=0 // pred_fallthru
    _

</llo_original>
